<compile_context>
chip_gen: v6e
topology: v6e:2x2x1
jax: 0.10.0
libtpu: 0.0.40
codegen_flags: <defaults>
</compile_context>

<pallas_src>
import jax
import jax.numpy as jnp
from jax.experimental import pallas as pl
from jax.experimental.pallas import tpu as pltpu


def _copy_kernel(x_ref, o_ref):
    # Identity: Tail.forward(x_list) == x_list[0]
    o_ref[...] = x_ref[...]


def _lane_dense_factorization(total):
    """Factor `total` elements into (rows, cols) with cols a multiple of 128."""
    for cols in (4096, 2048, 1024, 512, 256, 128):
        if total % cols == 0:
            return total // cols, cols
    return None


def _pick_block_rows(rows, cols, itemsize, budget_bytes=2 * 1024 * 1024):
    """Largest row-tile (multiple of 8, divides rows) under the VMEM budget."""
    max_rows = max(8, budget_bytes // (cols * itemsize))
    if rows <= max_rows:
        return rows  # full extent is always a legal block dim
    best = None
    r = 8
    while r <= max_rows:
        if rows % r == 0:
            best = r
        r += 8
    # Fallback: whole axis (legal, but only hit for awkward prime-ish sizes).
    return best if best is not None else rows


def tail_forward(x_list, use_pallas=True):
    """JAX/Pallas equivalent of Tail.forward: returns x_list[0]."""
    x = x_list[0]
    if not use_pallas:
        # Optimal path: an identity needs no kernel and no HBM traffic.
        return x

    total = x.size
    factor = _lane_dense_factorization(total)
    if factor is None:
        # Can't present a lane-dense 2D slab; the pure-JAX identity is free.
        return x

    rows, cols = factor
    x2 = x.reshape(rows, cols)           # free layout plumbing in the wrapper
    br = _pick_block_rows(rows, cols, x.dtype.itemsize)
    grid = (rows // br,)

    y2 = pl.pallas_call(
        _copy_kernel,
        out_shape=jax.ShapeDtypeStruct((rows, cols), x.dtype),
        grid=grid,
        in_specs=[pl.BlockSpec((br, cols), lambda i: (i, 0))],
        out_specs=pl.BlockSpec((br, cols), lambda i: (i, 0)),
        # Output aliases the input buffer: the "copy" degenerates to an
        # in-place touch instead of writing a second HBM buffer.
        input_output_aliases={0: 0},
        compiler_params=pltpu.CompilerParams(
            dimension_semantics=("parallel",),       # v7x: split grid across TCs
            vmem_limit_bytes=32 * 1024 * 1024,       # headroom for v7x (64 MiB phys)
        ),
    )(x2)
    return y2.reshape(x.shape)


class Tail:
    """Mirror of the PyTorch Tail(nn.Module). It has no parameters."""

    def __init__(self, n_feats):
        # Tail.__init__ registers no parameters; n_feats is unused.
        self.n_feats = n_feats

    def __call__(self, x_list):
        # use_pallas=True so the kernel path is exercised; in production the
        # zero-cost path is simply `return x_list[0]` (use_pallas=False).
        return tail_forward(x_list, use_pallas=True)


if __name__ == "__main__":
    key = jax.random.PRNGKey(0)
    k0, k1 = jax.random.split(key)

    # Small NCHW inputs consistent with an SR feature-map list (dtype kept as-is;
    # the kernel never upcasts since it is purely HBM-bandwidth bound).
    x0 = jax.random.normal(k0, (2, 4, 16, 16), dtype=jnp.float32)
    x1 = jax.random.normal(k1, (2, 4, 16, 16), dtype=jnp.float32)

    model = Tail(n_feats=4)
    out = jax.block_until_ready(model([x0, x1]))

    assert out.shape == x0.shape and out.dtype == x0.dtype
    assert bool(jnp.array_equal(out, x0))
    print("KERNEL_OK")
</pallas_src>

<mosaic_0001>
module attributes {stable_mosaic.version = 11 : i64} {
  func.func @_copy_kernel(%arg0: i32, %arg1: memref<1x2048xf32, #tpu.memory_space<vmem>>, %arg2: memref<1x2048xf32, #tpu.memory_space<vmem>>) attributes {dimension_semantics = [#tpu.dimension_semantics<parallel>], iteration_bounds = array<i64: 1>, scalar_prefetch = 0 : i64, scratch_operands = 0 : i64, tpu.core_type = #tpu.core_type<tc>, window_params = [{transform_indices = @transform_0, window_bounds = array<i64: 1, 2048>}, {transform_indices = @transform_1, window_bounds = array<i64: 1, 2048>}]} {
    %c0 = arith.constant 0 : index
    %c0_0 = arith.constant 0 : index
    %0 = vector.load %arg1[%c0, %c0_0] : memref<1x2048xf32, #tpu.memory_space<vmem>>, vector<1x2048xf32>
    %c0_1 = arith.constant 0 : index
    %c0_2 = arith.constant 0 : index
    %1 = vector.load %arg2[%c0_1, %c0_2] : memref<1x2048xf32, #tpu.memory_space<vmem>>, vector<1x2048xf32>
    tpu.vector_store %arg2[%c0_1, %c0_2], %0 {strides = array<i32>} : memref<1x2048xf32, #tpu.memory_space<vmem>>, vector<1x2048xf32>,
    return
  }
  func.func @transform_0(%arg0: i32) -> (i32, i32) {
    %c0_i32 = arith.constant 0 : i32
    %c0_i32_0 = arith.constant 0 : i32
    return %arg0, %c0_i32 : i32, i32
  }
  func.func @transform_1(%arg0: i32) -> (i32, i32) {
    %c0_i32 = arith.constant 0 : i32
    %c0_i32_0 = arith.constant 0 : i32
    return %arg0, %c0_i32 : i32, i32
  }
}

</mosaic_0001>

<llo_original>
// kernel: tpu_custom_call.1
$region0: #{tpu_custom_call.1}
  #allocation0 [shape = 'u32[]', space=smem, size = 0x4, offset = 0x4, fixed_abs, tag = 'smem constant byte address 0x4 - core index']
  #allocation1 [shape = 'u32[144,128]{1,0:T(1,128)}', space=vmem, size = 0x12000, scoped, tag = 'internal scratch']
  %s0 = inlined_call_operand.hbm [shape: f32[1,2048], index: 0, kind: input, shape index: {}, may-alias: {0,1}]
  %s1 = inlined_call_operand.hbm [shape: f32[1,2048], index: 1, kind: output, shape index: {}, may-alias: {0,1}]
  %s2 = sld [smem:[#allocation0]]
  $region18: #{tpu_custom_call.1} parent=0
    _
  %s4 = ssub.s32 1, %s2
  %s5 = scalar_select 0, %s4, %s2
  $region1: #{tpu_custom_call.1} parent=0
    #allocation2 [shape = 'u8[8192]{0}', space=vmem, size = 0x2000, scoped, tag = 'input window, operand 0, single buffered']
    #allocation3 [shape = 's32[1]{0}', space=sflag, size = 0x4, scoped, tag = 'scoped memory for tpu_custom_call.1']
    #allocation4 [shape = 's32[1]{0}', space=sflag, size = 0x4, scoped, tag = 'scoped memory for tpu_custom_call.1']
    #allocation5 [shape = 'u8[8192]{0}', space=vmem, size = 0x2000, scoped, tag = 'output window, operand 0, single buffered']
    %6 = vsyncpa [#allocation3], 0
    %7 = vsyncpa [#allocation4], 0
    // Predicated region
    $region2: #{tpu_custom_call.1} parent=1 // pred_check
      _
    $region3: #{tpu_custom_call.1} parent=1 // pred_check_branch
      %9 = sbr.rel (0) target = $region5
    $region4: #{tpu_custom_call.1} parent=1 // pred_region
      %s11 = ssub.s32 256, 256
      %12 = vsyncadd [#allocation3], %s11
      %s14 = sshll.u32 [#allocation2], 4
      %s15 = int_to_ptr.vmem [resolvable:$true] %s14
      %17 = dma.hbm_to_vmem [thread:$0]  %s0, 256, %s15, [#allocation3]
    $region5: #{tpu_custom_call.1} parent=1 // pred_fallthru
      _
    // Predicated region
    $region6: #{tpu_custom_call.1} parent=1 // pred_check
      _
    $region7: #{tpu_custom_call.1} parent=1 // pred_check_branch
      %19 = sbr.rel (0) target = $region9
    $region8: #{tpu_custom_call.1} parent=1 // pred_region
      %20 = dma.done [#allocation3], 256
    $region9: #{tpu_custom_call.1} parent=1 // pred_fallthru
      _
    %v21 = vld [vmem:[#allocation2] sm:$0xff]
    %v22 = vld [vmem:[#allocation2 + $0x8] sm:$0xff]
    %23 = vst [vmem:[#allocation5] sm:$0xff] %v21
    %24 = vst [vmem:[#allocation5 + $0x8] sm:$0xff] %v22
    // Predicated region
    $region10: #{tpu_custom_call.1} parent=1 // pred_check
      _
    $region11: #{tpu_custom_call.1} parent=1 // pred_check_branch
      %26 = sbr.rel (0) target = $region13
    $region12: #{tpu_custom_call.1} parent=1 // pred_region
      %s28 = ssub.s32 256, 256
      %29 = vsyncadd [#allocation4], %s28
      %s31 = sshll.u32 [#allocation5], 4
      %s32 = int_to_ptr.vmem [resolvable:$true] %s31
      %34 = dma.vmem_to_hbm [thread:$0]  %s32, 256, %s1, [#allocation4]
    $region13: #{tpu_custom_call.1} parent=1 // pred_fallthru
      _
    // Predicated region
    $region14: #{tpu_custom_call.1} parent=1 // pred_check
      _
    $region15: #{tpu_custom_call.1} parent=1 // pred_check_branch
      %36 = sbr.rel (0) target = $region17
    $region16: #{tpu_custom_call.1} parent=1 // pred_region
      %37 = dma.done [#allocation4], 256
    $region17: #{tpu_custom_call.1} parent=1 // pred_fallthru
      _
    %38 = vsyncpa [#allocation3], 1
    %39 = vsyncpa [#allocation4], 1

</llo_original>
